<compile_context>
chip_gen: v6e
topology: v6e:2x2x1
jax: 0.10.0
libtpu: 0.0.40
codegen_flags: <defaults>
</compile_context>

<pallas_src>
import jax
import jax.numpy as jnp
from jax.experimental import pallas as pl
from jax.experimental.pallas import tpu as pltpu


def _identity_kernel(x_ref, o_ref):
    # Whole array is resident in VMEM; single unmasked lane-dense copy.
    o_ref[...] = x_ref[...]


def generic_layer_forward(x):
    """Pallas implementation of GenericLayer.forward (identity pass-through).

    Note: for pure identity semantics the fastest path is simply `return x`;
    the Pallas call is kept as scaffolding for an eventual real `model` op.
    """
    orig_shape = x.shape
    n_elems = x.size
    lanes = 128

    if n_elems % lanes == 0:
        # Lane-dense 2-D slab; for (2,4,16,16) f32 this is (16, 128).
        slab_shape = (n_elems // lanes, lanes)
        x_slab = jnp.reshape(x, slab_shape)
    else:
        # Full-array block is allowed even when dims aren't (8,128)-divisible.
        slab_shape = orig_shape
        x_slab = x

    bytes_accessed = 2 * n_elems * x.dtype.itemsize

    out = pl.pallas_call(
        _identity_kernel,
        out_shape=jax.ShapeDtypeStruct(slab_shape, x.dtype),
        in_specs=[pl.BlockSpec(memory_space=pltpu.MemorySpace.VMEM)],
        out_specs=pl.BlockSpec(memory_space=pltpu.MemorySpace.VMEM),
        input_output_aliases={0: 0},
        cost_estimate=pl.CostEstimate(
            flops=0, transcendentals=0, bytes_accessed=bytes_accessed
        ),
        compiler_params=pltpu.CompilerParams(
            vmem_limit_bytes=32 * 1024 * 1024,
        ),
    )(x_slab)

    return jnp.reshape(out, orig_shape)


if __name__ == "__main__":
    key = jax.random.PRNGKey(0)
    # NCHW input, small shapes: batch=2, channels=4, spatial=16x16
    x = jax.random.normal(key, (2, 4, 16, 16), dtype=jnp.float32)

    fwd = jax.jit(generic_layer_forward)
    y = fwd(x)
    y = jax.block_until_ready(y)

    # Sanity check: identity semantics (model is None -> pass-through).
    assert y.shape == x.shape and y.dtype == x.dtype
    assert bool(jnp.allclose(y, x))

    print("KERNEL_OK")
</pallas_src>

<mosaic_0001>
module attributes {stable_mosaic.version = 11 : i64} {
  func.func @_identity_kernel(%arg0: memref<16x128xf32, #tpu.memory_space<vmem>>, %arg1: memref<16x128xf32, #tpu.memory_space<vmem>>) attributes {dimension_semantics = [], scalar_prefetch = 0 : i64, scratch_operands = 0 : i64, tpu.core_type = #tpu.core_type<tc>} {
    %c0 = arith.constant 0 : index
    %c0_0 = arith.constant 0 : index
    %0 = vector.load %arg0[%c0, %c0_0] : memref<16x128xf32, #tpu.memory_space<vmem>>, vector<16x128xf32>
    %c0_1 = arith.constant 0 : index
    %c0_2 = arith.constant 0 : index
    %1 = vector.load %arg1[%c0_1, %c0_2] : memref<16x128xf32, #tpu.memory_space<vmem>>, vector<16x128xf32>
    tpu.vector_store %arg1[%c0_1, %c0_2], %0 {strides = array<i32>} : memref<16x128xf32, #tpu.memory_space<vmem>>, vector<16x128xf32>,
    return
  }
}

</mosaic_0001>

<llo_original>
// kernel: generic_layer_forward.1
$region0: #{generic_layer_forward.1}
  #allocation0 [shape = 'u32[]', space=smem, size = 0x4, offset = 0x4, fixed_abs, tag = 'smem constant byte address 0x4 - core index']
  #allocation1 [shape = 'u32[144,128]{1,0:T(1,128)}', space=vmem, size = 0x12000, scoped, tag = 'internal scratch']
  %s0 = inlined_call_operand.vmem [shape: f32[16,128], index: 0, kind: input, shape index: {}, may-alias: {0,1}]
  %s1 = inlined_call_operand.vmem [shape: f32[16,128], index: 1, kind: output, shape index: {}, may-alias: {0,1}]
  %s2 = sld [smem:[#allocation0]]
  $region14: #{generic_layer_forward.1} parent=0
    _
  %s4 = ssub.s32 1, %s2
  %s5 = scalar_select 0, %s4, %s2
  // Predicated region
  $region2: #{generic_layer_forward.1} parent=0 // pred_check
    _
  $region3: #{generic_layer_forward.1} parent=0 // pred_check_branch
    %7 = sbr.rel (0) target = $region5
  $region4: #{generic_layer_forward.1} parent=0 // pred_region
    _
  $region5: #{generic_layer_forward.1} parent=0 // pred_fallthru
    _
  %v8 = vld [vmem:[%s0] sm:$0xff]
  %v9 = vld [vmem:[%s0 + $0x8] sm:$0xff]
  %10 = vst [vmem:[%s1] sm:$0xff] %v8
  %11 = vst [vmem:[%s1 + $0x8] sm:$0xff] %v9
  // Predicated region
  $region6: #{generic_layer_forward.1} parent=0 // pred_check
    _
  $region7: #{generic_layer_forward.1} parent=0 // pred_check_branch
    %13 = sbr.rel (0) target = $region9
  $region8: #{generic_layer_forward.1} parent=0 // pred_region
    _
  $region9: #{generic_layer_forward.1} parent=0 // pred_fallthru
    _
  // Predicated region
  $region10: #{generic_layer_forward.1} parent=0 // pred_check
    _
  $region11: #{generic_layer_forward.1} parent=0 // pred_check_branch
    %15 = sbr.rel (0) target = $region13
  $region12: #{generic_layer_forward.1} parent=0 // pred_region
    _
  $region13: #{generic_layer_forward.1} parent=0 // pred_fallthru
    _

</llo_original>
